<compile_context>
chip_gen: v7x
topology: tpu7x:2x2x1
jax: 0.10.0
libtpu: 0.0.40
codegen_flags: <defaults>
</compile_context>

<pallas_src>
import jax
import jax.numpy as jnp
from jax.experimental import pallas as pl
from jax.experimental.pallas import tpu as pltpu


# ------------------------------ helpers ----------------------------------

def _round_up(x, m):
    return ((x + m - 1) // m) * m


def _choose_tm(k_pad, n_pad, budget_bytes=12 << 20):
    """Largest M tile whose double-buffered f32 x/w/out blocks fit the budget."""
    tm = 512
    while tm > 8:
        need = 4 * 2 * (tm * k_pad + k_pad * n_pad + tm * n_pad)
        if need <= budget_bytes:
            return tm
        tm //= 2
    return 8


# ----------------------------- Pallas kernels -----------------------------

def _matmul_kernel(x_ref, w_ref, o_ref):
    # Bias is folded into w (ones column in x) -> single MXU matmul,
    # f32 accumulation, lane-dense store.
    o_ref[...] = jnp.dot(
        x_ref[...], w_ref[...], preferred_element_type=jnp.float32
    ).astype(o_ref.dtype)


def _grouped_matmul_kernel(tile_key_ref, x_ref, w_ref, o_ref):
    # tile_key_ref is the scalar-prefetch operand; it is only consumed by the
    # index_maps (weight selection), the body is a plain tile matmul.
    del tile_key_ref
    o_ref[...] = jnp.dot(
        x_ref[...], w_ref[...], preferred_element_type=jnp.float32
    ).astype(o_ref.dtype)


# ------------------------------ launchers ---------------------------------

def single_matmul(x_slab, w_bd):
    """Grid-less fast path: one matmul over the block-diagonal weight."""
    m, _ = x_slab.shape
    n = w_bd.shape[1]
    return pl.pallas_call(
        _matmul_kernel,
        out_shape=jax.ShapeDtypeStruct((m, n), x_slab.dtype),
        compiler_params=pltpu.CompilerParams(vmem_limit_bytes=32 << 20),
    )(x_slab, w_bd)


def grouped_matmul(tile_key, x_slab, w_stacked, tm):
    """MoE-style grouped matmul.

    x_slab:    (M_tot, k_pad)  rows of all tasks back-to-back, each task
               padded to a multiple of tm (so every tile has a single key).
    w_stacked: (num_keys, k_pad, n_pad)  ONE folded weight per key (dedup'd).
    tile_key:  (M_tot // tm,) int32  key index per M tile (scalar-prefetched).
    """
    m_tot, k_pad = x_slab.shape
    n_pad = w_stacked.shape[-1]
    num_tiles = m_tot // tm
    grid_spec = pltpu.PrefetchScalarGridSpec(
        num_scalar_prefetch=1,
        grid=(num_tiles,),
        in_specs=[
            pl.BlockSpec((tm, k_pad), lambda t, tk: (t, 0)),
            # same block index on consecutive tiles of the same key ->
            # Pallas skips the weight re-DMA.
            pl.BlockSpec((None, k_pad, n_pad), lambda t, tk: (tk[t], 0, 0)),
        ],
        out_specs=pl.BlockSpec((tm, n_pad), lambda t, tk: (t, 0)),
    )
    return pl.pallas_call(
        _grouped_matmul_kernel,
        grid_spec=grid_spec,
        out_shape=jax.ShapeDtypeStruct((m_tot, n_pad), x_slab.dtype),
        compiler_params=pltpu.CompilerParams(
            dimension_semantics=("parallel",),   # megacore split on v7x
            vmem_limit_bytes=32 << 20),
    )(tile_key, x_slab, w_stacked)


# --------------------- TensorMap-like Linear module ----------------------

class LinearTensorMap:
    """JAX analogue of equisolve.nn.Linear (ModuleTensorMap of nn.Linear)."""

    _FAST_PATH_LANE_LIMIT = 512      # block-diag path if K_tot/N_tot pad <= this
    _FAST_PATH_BYTE_LIMIT = 16 << 20  # and x + w + out comfortably fit in VMEM

    def __init__(self, key_to_shapes, prng_key, dtype=jnp.float32):
        # key_to_shapes: {block_key: (in_features, out_features)}
        self.dtype = dtype
        self.params = {}                       # torch convention (W:(out,in), b)
        self.shapes = dict(key_to_shapes)
        self.key_order = list(key_to_shapes.keys())
        self.key_index = {k: i for i, k in enumerate(self.key_order)}

        max_in = max(s[0] for s in key_to_shapes.values())
        max_out = max(s[1] for s in key_to_shapes.values())
        # +1 K row for the folded bias; lane-dense (multiple of 128) K / N.
        self.k_pad = _round_up(max_in + 1, 128)
        self.n_pad = _round_up(max(max_out, 1), 128)

        # ---- per-key folded weights for the grid path (deduplicated) ----
        folded = []
        for name in self.key_order:
            in_f, out_f = key_to_shapes[name]
            prng_key, kw, kb = jax.random.split(prng_key, 3)
            bound = 1.0 / float(in_f) ** 0.5
            w = jax.random.uniform(kw, (out_f, in_f), dtype, -bound, bound)
            b = jax.random.uniform(kb, (out_f,), dtype, -bound, bound)
            self.params[name] = (w, b)

            wf = jnp.zeros((self.k_pad, self.n_pad), dtype)
            wf = wf.at[:in_f, :out_f].set(w.T)     # pre-transposed once
            wf = wf.at[in_f, :out_f].set(b)         # bias folded at row in_f
            folded.append(wf)
        self.w_folded = jnp.stack(folded)           # (num_keys, k_pad, n_pad)

        # ---- block-diagonal layout for the tiny-feature fast path ----
        self.k_off, self.n_off = {}, {}
        k_cursor = n_cursor = 0
        for name in self.key_order:
            in_f, out_f = key_to_shapes[name]
            self.k_off[name] = k_cursor
            self.n_off[name] = n_cursor
            k_cursor += in_f + 1                    # +1 = per-key bias row
            n_cursor += out_f
        self.k_tot_pad = _round_up(max(k_cursor, 1), 128)
        self.n_tot_pad = _round_up(max(n_cursor, 1), 128)
        self._use_block_diag = (
            self.k_tot_pad <= self._FAST_PATH_LANE_LIMIT
            and self.n_tot_pad <= self._FAST_PATH_LANE_LIMIT
        )
        self.w_block_diag = None
        if self._use_block_diag:
            w_bd = jnp.zeros((self.k_tot_pad, self.n_tot_pad), dtype)
            for name in self.key_order:
                in_f, out_f = key_to_shapes[name]
                w, b = self.params[name]
                k0, n0 = self.k_off[name], self.n_off[name]
                w_bd = w_bd.at[k0:k0 + in_f, n0:n0 + out_f].set(w.T)
                w_bd = w_bd.at[k0 + in_f, n0:n0 + out_f].set(b)
            self.w_block_diag = w_bd

    # ----------------------------- forward -------------------------------

    def _gather_tasks(self, tensor_map):
        # One task per block-values array and per gradient array.  Tasks of
        # the same key stay consecutive (weight-DMA reuse on the grid path).
        tasks, flats = [], []
        for name, block in tensor_map.items():
            in_f, out_f = self.shapes[name]
            arrays = [("values", None, block["values"])]
            arrays += [("gradients", pn, gv)
                       for pn, gv in block.get("gradients", {}).items()]
            for kind, pname, arr in arrays:
                lead = arr.shape[:-1]
                x2d = jnp.asarray(arr, self.dtype).reshape(-1, arr.shape[-1])
                tasks.append(dict(name=name, kind=kind, pname=pname,
                                  lead=lead, rows=x2d.shape[0],
                                  in_f=in_f, out_f=out_f, row_off=0))
                flats.append(x2d)
        return tasks, flats

    def _block_diag_fits(self, m_pad):
        need = 4 * (m_pad * self.k_tot_pad
                    + self.k_tot_pad * self.n_tot_pad
                    + m_pad * self.n_tot_pad)
        return need <= self._FAST_PATH_BYTE_LIMIT

    def _forward_block_diag(self, tasks, flats):
        # Ragged concat: no max-M padding, one slab, one write per input.
        m_tot = sum(t["rows"] for t in tasks)
        m_pad = _round_up(max(m_tot, 1), 8)
        x_slab = jnp.zeros((m_pad, self.k_tot_pad), self.dtype)
        r = 0
        for t, x2d in zip(tasks, flats):
            k0, rows, in_f = self.k_off[t["name"]], t["rows"], t["in_f"]
            x_slab = x_slab.at[r:r + rows, k0:k0 + in_f].set(x2d)
            # ones column drives this key's folded bias only; padded rows
            # stay all-zero so padded output rows are exactly zero.
            x_slab = x_slab.at[r:r + rows, k0 + in_f].set(1.0)
            t["row_off"] = r
            r += rows
        return single_matmul(x_slab, self.w_block_diag)

    def _forward_grouped(self, tasks, flats):
        max_rows = max(t["rows"] for t in tasks)
        tm = _choose_tm(self.k_pad, self.n_pad)
        tm = max(8, min(tm, _round_up(max_rows, 8)))

        # Lay tasks back-to-back, each padded to a multiple of tm so every
        # M tile belongs to exactly one key.
        r, tile_keys = 0, []
        for t in tasks:
            t["row_off"] = r
            rows_pad = _round_up(max(t["rows"], 1), tm)
            tile_keys += [self.key_index[t["name"]]] * (rows_pad // tm)
            r += rows_pad
        x_slab = jnp.zeros((r, self.k_pad), self.dtype)
        for t, x2d in zip(tasks, flats):
            r0, rows, in_f = t["row_off"], t["rows"], t["in_f"]
            x_slab = x_slab.at[r0:r0 + rows, :in_f].set(x2d)
            x_slab = x_slab.at[r0:r0 + rows, in_f].set(1.0)   # folded bias
        tile_key = jnp.asarray(tile_keys, jnp.int32)
        return grouped_matmul(tile_key, x_slab, self.w_folded, tm)

    def forward(self, tensor_map, force_grouped=False):
        # tensor_map: {key: {"values": array, "gradients": {param: array}}}
        tasks, flats = self._gather_tasks(tensor_map)
        if not tasks:
            return {}

        m_tot = sum(t["rows"] for t in tasks)
        m_pad = _round_up(max(m_tot, 1), 8)
        use_fast = (self._use_block_diag and not force_grouped
                    and self._block_diag_fits(m_pad))
        if use_fast:
            y = self._forward_block_diag(tasks, flats)
        else:
            y = self._forward_grouped(tasks, flats)

        out = {name: {"values": None, "gradients": {}} for name in tensor_map}
        for t in tasks:
            r0, rows, out_f = t["row_off"], t["rows"], t["out_f"]
            c0 = self.n_off[t["name"]] if use_fast else 0
            yv = y[r0:r0 + rows, c0:c0 + out_f].reshape(*t["lead"], out_f)
            if t["kind"] == "values":
                out[t["name"]]["values"] = yv
            else:
                out[t["name"]]["gradients"][t["pname"]] = yv
        return out

    # TODO(synk): metatensor Labels/TensorBlock metadata (properties
    # relabeling via out_tensor, samples/components labels) has no Pallas
    # equivalent and is represented here by plain dict keys.


# --------------------------------- main ----------------------------------

if __name__ == "__main__":
    root = jax.random.PRNGKey(0)
    k0, k1, k2, kparams = jax.random.split(root, 4)

    # Two blocks with different (samples, components, in/out features),
    # mimicking a small TensorMap.
    tensor_map = {
        "key_0": {
            # (samples=8, components=3, in_features=16)
            "values": jax.random.normal(k0, (8, 3, 16), jnp.float32),
            "gradients": {
                # (grad samples=5, components=3, in_features=16)
                "positions": jax.random.normal(k2, (5, 3, 16), jnp.float32),
            },
        },
        "key_1": {
            # (samples=6, in_features=12)
            "values": jax.random.normal(k1, (6, 12), jnp.float32),
            "gradients": {},
        },
    }

    key_to_shapes = {"key_0": (16, 32), "key_1": (12, 24)}
    linear = LinearTensorMap(key_to_shapes, kparams)

    def check(out):
        # reference: torch nn.Linear convention, applied to values AND
        # gradients (as ModuleTensorMap.forward does).
        for name, block in tensor_map.items():
            w, b = linear.params[name]
            ref = jnp.einsum("...i,oi->...o", block["values"], w) + b
            assert jnp.allclose(out[name]["values"], ref, atol=1e-5), name
            for pname, gvals in block["gradients"].items():
                gref = jnp.einsum("...i,oi->...o", gvals, w) + b
                assert jnp.allclose(out[name]["gradients"][pname], gref,
                                    atol=1e-5), (name, pname)

    # Fast path (block-diagonal single matmul) — used at these tiny sizes.
    out_fast = linear.forward(tensor_map)
    jax.block_until_ready(out_fast)
    check(out_fast)

    # Grid path (dedup'd weights + scalar-prefetched key ids) — exercised
    # explicitly so the large-feature fallback is also validated on TPU.
    out_grid = linear.forward(tensor_map, force_grouped=True)
    jax.block_until_ready(out_grid)
    check(out_grid)

    assert out_fast["key_0"]["values"].shape == (8, 3, 32)
    assert out_fast["key_0"]["gradients"]["positions"].shape == (5, 3, 32)
    assert out_fast["key_1"]["values"].shape == (6, 24)

    print("KERNEL_OK")
</pallas_src>

<mosaic_0001>
module attributes {stable_mosaic.version = 11 : i64} {
  func.func @_matmul_kernel(%arg0: memref<48x128xf32, #tpu.memory_space<vmem>>, %arg1: memref<128x128xf32, #tpu.memory_space<vmem>>, %arg2: memref<48x128xf32, #tpu.memory_space<vmem>>) attributes {dimension_semantics = [], scalar_prefetch = 0 : i64, scratch_operands = 0 : i64, tpu.core_type = #tpu.core_type<tc>} {
    %c0 = arith.constant 0 : index
    %c0_0 = arith.constant 0 : index
    %0 = vector.load %arg0[%c0, %c0_0] : memref<48x128xf32, #tpu.memory_space<vmem>>, vector<48x128xf32>
    %c0_1 = arith.constant 0 : index
    %c0_2 = arith.constant 0 : index
    %1 = vector.load %arg1[%c0_1, %c0_2] : memref<128x128xf32, #tpu.memory_space<vmem>>, vector<128x128xf32>
    %cst = arith.constant dense<0.000000e+00> : vector<48x128xf32>
    %2 = tpu.matmul %0, %1, %cst {dimension_numbers = #tpu.dot_dimension_numbers<[1], [0], [0], [1], [0, 0, 1, 1], [], []>} : vector<48x128xf32>, vector<128x128xf32>, vector<48x128xf32> -> vector<48x128xf32>
    %c0_3 = arith.constant 0 : index
    %c0_4 = arith.constant 0 : index
    %3 = vector.load %arg2[%c0_3, %c0_4] : memref<48x128xf32, #tpu.memory_space<vmem>>, vector<48x128xf32>
    tpu.vector_store %arg2[%c0_3, %c0_4], %2 {strides = array<i32>} : memref<48x128xf32, #tpu.memory_space<vmem>>, vector<48x128xf32>,
    return
  }
}

</mosaic_0001>

<llo_original>
// kernel: tpu_custom_call.1
$region0: #{tpu_custom_call.1}
  #allocation0 [shape = 'u32[]', space=smem, size = 0x4, offset = 0x4, fixed_abs, tag = 'smem constant byte address 0x4 - core index']
  #allocation1 [shape = 'u32[144,128]{1,0:T(1,128)}', space=vmem, size = 0x12000, scoped, tag = 'internal scratch']
  %s0 = inlined_call_operand.hbm [shape: f32[48,128], index: 0, kind: input, shape index: {}]
  %s1 = inlined_call_operand.hbm [shape: f32[128,128], index: 1, kind: input, shape index: {}]
  %s2 = inlined_call_operand.hbm [shape: f32[48,128], index: 2, kind: output, shape index: {}]
  %s3 = sld [smem:[#allocation0]]
  $region26: #{tpu_custom_call.1} parent=0
    _
  %s5 = ssub.s32 1, %s3
  %s6 = scalar_select 0, %s5, %s3
  $region1: #{tpu_custom_call.1} parent=0
    #allocation2 [shape = 'u8[24576]{0}', space=vmem, size = 0x6000, scoped, tag = 'input window, operand 0, single buffered']
    #allocation3 [shape = 's32[1]{0}', space=sflag, size = 0x4, scoped, tag = 'scoped memory for tpu_custom_call.1']
    #allocation4 [shape = 's32[1]{0}', space=sflag, size = 0x4, scoped, tag = 'scoped memory for tpu_custom_call.1']
    #allocation5 [shape = 'u8[65536]{0}', space=vmem, size = 0x10000, scoped, tag = 'input window, operand 1, single buffered']
    #allocation6 [shape = 's32[1]{0}', space=sflag, size = 0x4, scoped, tag = 'scoped memory for tpu_custom_call.1']
    #allocation7 [shape = 'u8[24576]{0}', space=vmem, size = 0x6000, scoped, tag = 'output window, operand 0, single buffered']
    %7 = vsyncpa [#allocation3], 0
    %8 = vsyncpa [#allocation6], 0
    %9 = vsyncpa [#allocation4], 0
    // Predicated region
    $region2: #{tpu_custom_call.1} parent=1 // pred_check
      _
    $region3: #{tpu_custom_call.1} parent=1 // pred_check_branch
      %11 = sbr.rel (0) target = $region5
    $region4: #{tpu_custom_call.1} parent=1 // pred_region
      %s13 = ssub.s32 768, 768
      %14 = vsyncadd [#allocation3], %s13
      %s15 = sshll.u32 [#allocation2], 4
      %s16 = int_to_ptr.vmem [resolvable:$true] %s15
      %21 = dma.hbm_to_vmem [thread:$0]  %s0, 768, %s16, [#allocation3], 128, 128, 8
    $region5: #{tpu_custom_call.1} parent=1 // pred_fallthru
      _
    // Predicated region
    $region6: #{tpu_custom_call.1} parent=1 // pred_check
      _
    $region7: #{tpu_custom_call.1} parent=1 // pred_check_branch
      %23 = sbr.rel (0) target = $region9
    $region8: #{tpu_custom_call.1} parent=1 // pred_region
      %s25 = ssub.s32 2048, 2048
      %26 = vsyncadd [#allocation6], %s25
      %s27 = sshll.u32 [#allocation5], 4
      %s28 = int_to_ptr.vmem [resolvable:$true] %s27
      %33 = dma.hbm_to_vmem [thread:$0]  %s1, 2048, %s28, [#allocation6], 128, 128, 8
    $region9: #{tpu_custom_call.1} parent=1 // pred_fallthru
      _
    // Predicated region
    $region10: #{tpu_custom_call.1} parent=1 // pred_check
      _
    $region11: #{tpu_custom_call.1} parent=1 // pred_check_branch
      %35 = sbr.rel (0) target = $region13
    $region12: #{tpu_custom_call.1} parent=1 // pred_region
      %36 = dma.done [#allocation3], 768
    $region13: #{tpu_custom_call.1} parent=1 // pred_fallthru
      _
    // Predicated region
    $region14: #{tpu_custom_call.1} parent=1 // pred_check
      _
    $region15: #{tpu_custom_call.1} parent=1 // pred_check_branch
      %38 = sbr.rel (0) target = $region17
    $region16: #{tpu_custom_call.1} parent=1 // pred_region
      %39 = dma.done [#allocation6], 2048
    $region17: #{tpu_custom_call.1} parent=1 // pred_fallthru
      _
    %v40 = vld [vmem:[#allocation2] sm:$0xff]
    %v41 = vld [vmem:[#allocation2 + $0x8] sm:$0xff]
    %v42 = vld [vmem:[#allocation2 + $0x10] sm:$0xff]
    %v43 = vld [vmem:[#allocation2 + $0x18] sm:$0xff]
    %v44 = vld [vmem:[#allocation2 + $0x20] sm:$0xff]
    %v45 = vld [vmem:[#allocation2 + $0x28] sm:$0xff]
    %v46 = vld [vmem:[#allocation5] sm:$0xff]
    %v47 = vld [vmem:[#allocation5 + $0x8] sm:$0xff]
    %v48 = vld [vmem:[#allocation5 + $0x10] sm:$0xff]
    %v49 = vld [vmem:[#allocation5 + $0x18] sm:$0xff]
    %v50 = vld [vmem:[#allocation5 + $0x20] sm:$0xff]
    %v51 = vld [vmem:[#allocation5 + $0x28] sm:$0xff]
    %v52 = vld [vmem:[#allocation5 + $0x30] sm:$0xff]
    %v53 = vld [vmem:[#allocation5 + $0x38] sm:$0xff]
    %v54 = vld [vmem:[#allocation5 + $0x40] sm:$0xff]
    %v55 = vld [vmem:[#allocation5 + $0x48] sm:$0xff]
    %v56 = vld [vmem:[#allocation5 + $0x50] sm:$0xff]
    %v57 = vld [vmem:[#allocation5 + $0x58] sm:$0xff]
    %v58 = vld [vmem:[#allocation5 + $0x60] sm:$0xff]
    %v59 = vld [vmem:[#allocation5 + $0x68] sm:$0xff]
    %v60 = vld [vmem:[#allocation5 + $0x70] sm:$0xff]
    %v61 = vld [vmem:[#allocation5 + $0x78] sm:$0xff]
    %62 = vmatprep.subr.mxu0 0.0
    %63 = vmatpush1.msra.mxu0 %v46
    %64 = vmatprep.subr.mxu0 0.0
    %65 = vmatpush1.msra.mxu0 %v47
    %66 = vmatprep.subr.mxu0 0.0
    %67 = vmatpush1.msra.mxu0 %v48
    %68 = vmatprep.subr.mxu0 0.0
    %69 = vmatpush1.msra.mxu0 %v49
    %70 = vmatprep.subr.mxu0 0.0
    %71 = vmatpush1.msra.mxu0 %v50
    %72 = vmatprep.subr.mxu0 0.0
    %73 = vmatpush1.msra.mxu0 %v51
    %74 = vmatprep.subr.mxu0 0.0
    %75 = vmatpush1.msra.mxu0 %v52
    %76 = vmatprep.subr.mxu0 0.0
    %77 = vmatpush1.msra.mxu0 %v53
    %78 = vmatprep.subr.mxu0 0.0
    %79 = vmatpush1.msra.mxu0 %v54
    %80 = vmatprep.subr.mxu0 0.0
    %81 = vmatpush1.msra.mxu0 %v55
    %82 = vmatprep.subr.mxu0 0.0
    %83 = vmatpush1.msra.mxu0 %v56
    %84 = vmatprep.subr.mxu0 0.0
    %85 = vmatpush1.msra.mxu0 %v57
    %86 = vmatprep.subr.mxu0 0.0
    %87 = vmatpush1.msra.mxu0 %v58
    %88 = vmatprep.subr.mxu0 0.0
    %89 = vmatpush1.msra.mxu0 %v59
    %90 = vmatprep.subr.mxu0 0.0
    %91 = vmatpush1.msra.mxu0 %v60
    %92 = vmatprep.subr.mxu0 0.0
    %93 = vmatpush1.msra.mxu0 %v61
    %94 = vmatprep.subr.mxu0 0.0
    %95 = vmatpush1.msra.mxu0 0.0
    %96 = vmatprep.subr.mxu0 0.0
    %97 = vmatpush1.msra.mxu0 0.0
    %98 = vmatprep.subr.mxu0 0.0
    %99 = vmatpush1.msra.mxu0 0.0
    %100 = vmatprep.subr.mxu0 0.0
    %101 = vmatpush1.msra.mxu0 0.0
    %102 = vmatprep.subr.mxu0 0.0
    %103 = vmatpush1.msra.mxu0 0.0
    %104 = vmatprep.subr.mxu0 0.0
    %105 = vmatpush1.msra.mxu0 0.0
    %106 = vmatprep.subr.mxu0 0.0
    %107 = vmatpush1.msra.mxu0 0.0
    %108 = vmatprep.subr.mxu0 0.0
    %109 = vmatpush1.msra.mxu0 0.0
    %110 = vmatprep.subr.mxu0 0.0
    %111 = vmatpush1.msra.mxu0 0.0
    %112 = vmatprep.subr.mxu0 0.0
    %113 = vmatpush1.msra.mxu0 0.0
    %114 = vmatprep.subr.mxu0 0.0
    %115 = vmatpush1.msra.mxu0 0.0
    %116 = vmatprep.subr.mxu0 0.0
    %117 = vmatpush1.msra.mxu0 0.0
    %118 = vmatprep.subr.mxu0 0.0
    %119 = vmatpush1.msra.mxu0 0.0
    %120 = vmatprep.subr.mxu0 0.0
    %121 = vmatpush1.msra.mxu0 0.0
    %122 = vmatprep.subr.mxu0 0.0
    %123 = vmatpush1.msra.mxu0 0.0
    %124 = vmatprep.subr.mxu0 0.0
    %125 = vmatpush1.msra.mxu0 0.0
    %126 = vmatprep.mubr.f32.mxu0 0.0
    %127 = vmatmul.mubr.f32.gmra.mrb[0].mxu0 %v40
    %v128 = vpop.f32.mrb[0].mxu0
    %v129 = vadd.f32 0.0, %v128
    %v130 = vpop.f32.mrb[0].mxu0
    %131 = vmatprep.mubr.f32.mxu0 0.0
    %132 = vmatmul.mubr.f32.gmra.mrb[0].mxu0 %v41
    %v133 = vpop.f32.mrb[0].mxu0
    %v134 = vadd.f32 0.0, %v133
    %v135 = vpop.f32.mrb[0].mxu0
    %136 = vmatprep.mubr.f32.mxu0 0.0
    %137 = vmatmul.mubr.f32.gmra.mrb[0].mxu0 %v42
    %v138 = vpop.f32.mrb[0].mxu0
    %v139 = vadd.f32 0.0, %v138
    %v140 = vpop.f32.mrb[0].mxu0
    %141 = vmatprep.mubr.f32.mxu0 0.0
    %142 = vmatmul.mubr.f32.gmra.mrb[0].mxu0 %v43
    %v143 = vpop.f32.mrb[0].mxu0
    %v144 = vadd.f32 0.0, %v143
    %v145 = vpop.f32.mrb[0].mxu0
    %146 = vmatprep.mubr.f32.mxu0 0.0
    %147 = vmatmul.mubr.f32.gmra.mrb[0].mxu0 %v44
    %v148 = vpop.f32.mrb[0].mxu0
    %v149 = vadd.f32 0.0, %v148
    %v150 = vpop.f32.mrb[0].mxu0
    %151 = vmatprep.mubr.f32.mxu0 0.0
    %152 = vmatmul.mubr.f32.gmra.mrb[0].mxu0 %v45
    %v153 = vpop.f32.mrb[0].mxu0
    %v154 = vadd.f32 0.0, %v153
    %v155 = vpop.f32.mrb[0].mxu0
    %156 = vdwg.mxu0
    %157 = vst [vmem:[#allocation7] sm:$0xff] %v129
    %158 = vst [vmem:[#allocation7 + $0x8] sm:$0xff] %v134
    %159 = vst [vmem:[#allocation7 + $0x10] sm:$0xff] %v139
    %160 = vst [vmem:[#allocation7 + $0x18] sm:$0xff] %v144
    %161 = vst [vmem:[#allocation7 + $0x20] sm:$0xff] %v149
    %162 = vst [vmem:[#allocation7 + $0x28] sm:$0xff] %v154
    // Predicated region
    $region18: #{tpu_custom_call.1} parent=1 // pred_check
      _
    $region19: #{tpu_custom_call.1} parent=1 // pred_check_branch
      %164 = sbr.rel (0) target = $region21
    $region20: #{tpu_custom_call.1} parent=1 // pred_region
      %s166 = ssub.s32 768, 768
      %167 = vsyncadd [#allocation4], %s166
      %s168 = sshll.u32 [#allocation7], 4
      %s169 = int_to_ptr.vmem [resolvable:$true] %s168
      %174 = dma.vmem_to_hbm [thread:$0]  %s169, 768, %s2, [#allocation4], 128, 128, 8
    $region21: #{tpu_custom_call.1} parent=1 // pred_fallthru
      _
    // Predicated region
    $region22: #{tpu_custom_call.1} parent=1 // pred_check
      _
    $region23: #{tpu_custom_call.1} parent=1 // pred_check_branch
      %176 = sbr.rel (0) target = $region25
    $region24: #{tpu_custom_call.1} parent=1 // pred_region
      %177 = dma.done [#allocation4], 768
    $region25: #{tpu_custom_call.1} parent=1 // pred_fallthru
      _
    %178 = vsyncpa [#allocation3], 1
    %179 = vsyncpa [#allocation6], 1
    %180 = vsyncpa [#allocation4], 1

</llo_original>
